<compile_context>
chip_gen: v7x
topology: tpu7x:2x2x1
jax: 0.10.0
libtpu: 0.0.40
codegen_flags: <defaults>
</compile_context>

<pallas_src>
import functools

import jax
import jax.numpy as jnp
from jax.experimental import pallas as pl
from jax.experimental.pallas import tpu as pltpu


def _round_up(x, m):
    return (x + m - 1) // m * m


def _vmem_capacity_bytes():
    """Physical VMEM per TensorCore; falls back to the v7x 64 MiB minimum."""
    try:
        cap = getattr(pltpu.get_tpu_info(), "vmem_capacity_bytes", None)
        if cap:
            return int(cap)
    except Exception:
        pass
    return 64 << 20


def _fused_kernel(layer_norm, resident, x_ref, w1_ref, w2_ref, b1_ref, b2_ref,
                  o_ref):
    """Grid = (row_tiles, L).  One step: hop `li` of one row tile.

    x_ref  : (1, TILE_N, nfeat_p)        hop features            (compute dtype)
    w1_ref : (L|1, nfeat_p, nhid_p)      fc1 weight, transposed   (compute dtype)
    w2_ref : (L|1, nhid_p, C_pad)        fc2 slice, mask-scaled   (compute dtype)
    b1_ref : (L, 1, nhid_p)              fc1 bias  (f32, padded lanes = 0)
    b2_ref : (1, C_pad)                  fc2 bias  (f32, padded lanes = -1e30)
    o_ref  : (TILE_N, C_pad)             logits accumulator -> log-probs (f32)
    """
    li = pl.program_id(1)

    @pl.when(li == 0)
    def _init():
        o_ref[...] = jnp.zeros_like(o_ref)

    hop = li if resident else 0
    x = x_ref[0]                                           # (TILE_N, nfeat_p)
    h = jnp.dot(x, w1_ref[hop], preferred_element_type=jnp.float32)
    h = h + b1_ref[li]

    if layer_norm:
        # F.normalize(p=2, dim=1): h / max(||h||, 1e-12) == h * rsqrt(max(ss,1e-24))
        sumsq = jnp.sum(h * h, axis=1, keepdims=True)
        h = h * jax.lax.rsqrt(jnp.maximum(sumsq, 1e-24))

    # ReLU commutes with concat; softmax(att) mask (>= 0) is folded into w2.
    h = jnp.maximum(h, 0.0)

    o_ref[...] += jnp.dot(h.astype(w2_ref.dtype), w2_ref[hop],
                          preferred_element_type=jnp.float32)

    @pl.when(li == pl.num_programs(1) - 1)
    def _finalize():
        logits = o_ref[...] + b2_ref[...]          # padded class lanes -> -1e30
        m = jnp.max(logits, axis=1, keepdims=True)
        shifted = logits - m
        lse = jnp.log(jnp.sum(jnp.exp(shifted), axis=1, keepdims=True))
        o_ref[...] = (shifted - lse).astype(o_ref.dtype)


def fsgnn_forward(list_mat, params, layer_norm=True,
                  compute_dtype=jnp.bfloat16, tile_n=None):
    """FSGNN forward (eval mode).  list_mat: list of (N, nfeat) or (L, N, nfeat)."""
    w1 = params["w1"]       # (L, nhidden, nfeat)   PyTorch Linear layout
    b1 = params["b1"]       # (L, nhidden)
    w2 = params["w2"]       # (nclass, L*nhidden)
    b2 = params["b2"]       # (nclass,)
    att = params["att"]     # (L,)

    L, nhidden, nfeat = w1.shape
    nclass = w2.shape[0]

    # Accept a pre-stacked (L, N, nfeat) array to avoid the stack copy.
    if isinstance(list_mat, (list, tuple)):
        mats = jnp.stack(list_mat, axis=0)
    else:
        mats = list_mat
    N = mats.shape[1]

    nfeat_p = _round_up(nfeat, 128)               # MXU contraction dim
    nhid_p = max(_round_up(nhidden, 8), 128)      # lane-dense hidden dim
    c_pad = _round_up(nclass, 128)                # lane-dense class dim
    dsize = jnp.dtype(compute_dtype).itemsize

    # Inputs: copy only when a cast or a feature pad is actually needed.
    # Rows (N) are never padded: the last row tile is ragged (row-local).
    if mats.dtype != compute_dtype or nfeat_p != nfeat:
        mats = jnp.pad(mats.astype(compute_dtype),
                       ((0, 0), (0, 0), (0, nfeat_p - nfeat)))

    # fc1 weights pre-transposed to (L, nfeat_p, nhid_p); zero padding is exact.
    w1t = jnp.pad(jnp.transpose(w1, (0, 2, 1)),
                  ((0, 0), (0, nfeat_p - nfeat), (0, nhid_p - nhidden)))
    w1t = w1t.astype(compute_dtype)
    b1r = jnp.pad(b1, ((0, 0), (0, nhid_p - nhidden))).reshape(
        L, 1, nhid_p).astype(jnp.float32)

    # fc2 per-hop slices (L, nhid_p, c_pad) with softmax(att) folded in
    # (mask >= 0 so relu(mask*h) == mask*relu(h)); padded bias lanes -> -1e30.
    mask = jax.nn.softmax(att)
    w2lt = jnp.transpose(w2.reshape(nclass, L, nhidden), (1, 2, 0))
    w2lt = w2lt * mask[:, None, None]
    w2p = jnp.pad(w2lt, ((0, 0), (0, nhid_p - nhidden), (0, c_pad - nclass)))
    w2p = w2p.astype(compute_dtype)
    b2p = jnp.full((1, c_pad), -1e30, jnp.float32).at[0, :nclass].set(
        b2.astype(jnp.float32))

    # --- VMEM budgeting, derived from the running chip's physical VMEM ---
    cap = _vmem_capacity_bytes()
    budget = min(int(cap * 0.70), 96 << 20)

    w1_bytes = L * nfeat_p * nhid_p * dsize
    w2_bytes = L * nhid_p * c_pad * dsize
    # Keep all hops' weights resident (one fetch total) when they fit
    # comfortably; otherwise fall back to per-hop double-buffered slices.
    resident = 2 * (w1_bytes + w2_bytes) <= budget // 2
    w_alloc = 2 * (w1_bytes + w2_bytes) if resident \
        else 2 * (w1_bytes + w2_bytes) // L

    x_row = nfeat_p * dsize
    out_row = c_pad * 4
    row_budget = max(budget - w_alloc - (2 << 20), 4 << 20)
    tile_cap = max(8, (row_budget // (2 * x_row + 2 * out_row)) // 8 * 8)

    if tile_n is None:
        tile_n = 4096
    tile_n = max(8, min(tile_n, tile_cap, _round_up(N, 8)) // 8 * 8)
    # Keep both v7x TensorCores busy (row axis is "parallel"): force >=2 row
    # tiles when N is large enough for the split to matter.
    if N >= 1024 and tile_n >= N:
        tile_n = _round_up((N + 1) // 2, 8)
    num_row_tiles = -(-N // tile_n)

    need = (2 * tile_n * x_row + 2 * tile_n * out_row + w_alloc
            + 2 * (L * nhid_p * 4 + c_pad * 4))
    vmem_limit = int(min(cap, max(need + (4 << 20), 32 << 20)))

    if resident:
        w1_spec = pl.BlockSpec((L, nfeat_p, nhid_p), lambda r, i: (0, 0, 0))
        w2_spec = pl.BlockSpec((L, nhid_p, c_pad), lambda r, i: (0, 0, 0))
    else:
        w1_spec = pl.BlockSpec((1, nfeat_p, nhid_p), lambda r, i: (i, 0, 0))
        w2_spec = pl.BlockSpec((1, nhid_p, c_pad), lambda r, i: (i, 0, 0))

    # F.dropout(out, p, training=False) is the identity -> inference path.
    # TODO(synk): training-mode dropout (Bernoulli mask via pltpu.prng_*) not emitted.

    out = pl.pallas_call(
        functools.partial(_fused_kernel, layer_norm, resident),
        out_shape=jax.ShapeDtypeStruct((N, c_pad), jnp.float32),
        grid_spec=pltpu.PrefetchScalarGridSpec(
            num_scalar_prefetch=0,
            grid=(num_row_tiles, L),
            in_specs=[
                pl.BlockSpec((1, tile_n, nfeat_p), lambda r, i: (i, r, 0)),  # mats
                w1_spec,                                                     # fc1 W^T
                w2_spec,                                                     # fc2 slices
                pl.BlockSpec((L, 1, nhid_p), lambda r, i: (0, 0, 0)),        # fc1 bias
                pl.BlockSpec((1, c_pad), lambda r, i: (0, 0)),               # fc2 bias
            ],
            out_specs=pl.BlockSpec((tile_n, c_pad), lambda r, i: (r, 0)),
        ),
        compiler_params=pltpu.CompilerParams(
            dimension_semantics=("parallel", "arbitrary"),
            vmem_limit_bytes=vmem_limit),
    )(mats, w1t, w2p, b1r, b2p)

    return out[:N, :nclass]


def _reference(list_mat, params, layer_norm=True):
    """Pure-JAX replica of the PyTorch forward (eval mode) for verification."""
    w1, b1, w2, b2, att = (params[k] for k in ("w1", "b1", "w2", "b2", "att"))
    mask = jax.nn.softmax(att)
    outs = []
    for i, mat in enumerate(list_mat):
        h = mat @ w1[i].T + b1[i]
        if layer_norm:
            h = h / jnp.maximum(jnp.linalg.norm(h, axis=1, keepdims=True), 1e-12)
        outs.append(mask[i] * h)
    final = jnp.concatenate(outs, axis=1)
    final = jax.nn.relu(final)
    logits = final @ w2.T + b2
    return jax.nn.log_softmax(logits, axis=1)


def _init_params(key, nfeat, nlayers, nhidden, nclass):
    """Deterministic init mimicking nn.Linear default U(-1/sqrt(in), 1/sqrt(in))."""
    ks = jax.random.split(key, 5)
    bound1 = 1.0 / jnp.sqrt(nfeat)
    bound2 = 1.0 / jnp.sqrt(nhidden * nlayers)
    w1 = jax.random.uniform(ks[0], (nlayers, nhidden, nfeat), jnp.float32,
                            -bound1, bound1)
    b1 = jax.random.uniform(ks[1], (nlayers, nhidden), jnp.float32, -bound1, bound1)
    w2 = jax.random.uniform(ks[2], (nclass, nhidden * nlayers), jnp.float32,
                            -bound2, bound2)
    b2 = jax.random.uniform(ks[3], (nclass,), jnp.float32, -bound2, bound2)
    att = jnp.ones((nlayers,), jnp.float32)   # requires_grad=False, fixed ones
    return {"w1": w1, "b1": b1, "w2": w2, "b2": b2, "att": att}


if __name__ == "__main__":
    nfeat, nlayers, nhidden, nclass = 32, 3, 128, 8
    key = jax.random.PRNGKey(0)
    k_param, k_a, k_b, k_c = jax.random.split(key, 4)
    params = _init_params(k_param, nfeat, nlayers, nhidden, nclass)

    # Case 1: small aligned N, f32 compute — must match the reference tightly.
    N = 64
    k_mats = jax.random.split(k_a, nlayers)
    list_mat = [jax.random.normal(k_mats[i], (N, nfeat), jnp.float32)
                for i in range(nlayers)]
    out = jax.block_until_ready(
        fsgnn_forward(list_mat, params, layer_norm=True,
                      compute_dtype=jnp.float32))
    ref = _reference(list_mat, params, layer_norm=True)
    assert out.shape == (N, nclass)
    assert bool(jnp.all(jnp.isfinite(out)))
    assert bool(jnp.allclose(out, ref, atol=1e-4, rtol=1e-4)), "f32 mismatch"

    # Case 1b: layer_norm=False path.
    out_nl = jax.block_until_ready(
        fsgnn_forward(list_mat, params, layer_norm=False,
                      compute_dtype=jnp.float32))
    ref_nl = _reference(list_mat, params, layer_norm=False)
    assert bool(jnp.allclose(out_nl, ref_nl, atol=1e-4, rtol=1e-4)), "no-norm mismatch"

    # Case 2: non-aligned N exercises the ragged last row tile + feature pad.
    N2 = 100
    k_mats2 = jax.random.split(k_b, nlayers)
    list_mat2 = [jax.random.normal(k_mats2[i], (N2, nfeat), jnp.float32)
                 for i in range(nlayers)]
    out2 = jax.block_until_ready(
        fsgnn_forward(list_mat2, params, layer_norm=True,
                      compute_dtype=jnp.float32))
    ref2 = _reference(list_mat2, params, layer_norm=True)
    assert out2.shape == (N2, nclass)
    assert bool(jnp.allclose(out2, ref2, atol=1e-4, rtol=1e-4)), "ragged-N mismatch"

    # Case 3: larger N exercises multiple row tiles (>=2 tiles rule) + ragged tail.
    N3 = 1300
    k_mats3 = jax.random.split(k_c, nlayers)
    list_mat3 = [jax.random.normal(k_mats3[i], (N3, nfeat), jnp.float32)
                 for i in range(nlayers)]
    out3 = jax.block_until_ready(
        fsgnn_forward(list_mat3, params, layer_norm=True,
                      compute_dtype=jnp.float32))
    ref3 = _reference(list_mat3, params, layer_norm=True)
    assert out3.shape == (N3, nclass)
    assert bool(jnp.allclose(out3, ref3, atol=1e-4, rtol=1e-4)), "multi-tile mismatch"

    # Case 4: default bf16 MXU operands (f32 accumulation / normalize / softmax).
    out_bf16 = jax.block_until_ready(
        fsgnn_forward(list_mat, params, layer_norm=True))
    assert bool(jnp.all(jnp.isfinite(out_bf16)))
    assert float(jnp.max(jnp.abs(out_bf16 - ref))) < 0.1, "bf16 drift too large"

    print("KERNEL_OK")
</pallas_src>

<mosaic_0001>
module attributes {stable_mosaic.version = 11 : i64} {
  func.func @_fused_kernel(%arg0: i32, %arg1: i32, %arg2: memref<1x64x128xf32, #tpu.memory_space<vmem>>, %arg3: memref<3x128x128xf32, #tpu.memory_space<vmem>>, %arg4: memref<3x128x128xf32, #tpu.memory_space<vmem>>, %arg5: memref<3x1x128xf32, #tpu.memory_space<vmem>>, %arg6: memref<1x128xf32, #tpu.memory_space<vmem>>, %arg7: memref<64x128xf32, #tpu.memory_space<vmem>>) attributes {dimension_semantics = [#tpu.dimension_semantics<parallel>, #tpu.dimension_semantics<arbitrary>], iteration_bounds = array<i64: 1, 3>, scalar_prefetch = 0 : i64, scratch_operands = 0 : i64, tpu.core_type = #tpu.core_type<tc>, window_params = [{transform_indices = @transform_0, window_bounds = array<i64: 1, 64, 128>}, {pipeline_mode = #tpu.pipeline_mode<synchronous>, transform_indices = @transform_1, window_bounds = array<i64: 3, 128, 128>}, {pipeline_mode = #tpu.pipeline_mode<synchronous>, transform_indices = @transform_2, window_bounds = array<i64: 3, 128, 128>}, {pipeline_mode = #tpu.pipeline_mode<synchronous>, transform_indices = @transform_3, window_bounds = array<i64: 3, 1, 128>}, {pipeline_mode = #tpu.pipeline_mode<synchronous>, transform_indices = @transform_4, window_bounds = array<i64: 1, 128>}, {transform_indices = @transform_5, window_bounds = array<i64: 64, 128>}]} {
    %c0_i32 = arith.constant 0 : i32
    %0 = arith.cmpi eq, %arg1, %c0_i32 : i32
    %1 = arith.extui %0 : i1 to i32
    %c0_i32_0 = arith.constant 0 : i32
    %2 = arith.cmpi ne, %1, %c0_i32_0 : i32
    scf.if %2 {
      %cst_18 = arith.constant 0.000000e+00 : f32
      %34 = vector.broadcast %cst_18 : f32 to vector<64x128xf32>
      %c0_19 = arith.constant 0 : index
      %c0_20 = arith.constant 0 : index
      %35 = vector.load %arg7[%c0_19, %c0_20] : memref<64x128xf32, #tpu.memory_space<vmem>>, vector<64x128xf32>
      tpu.vector_store %arg7[%c0_19, %c0_20], %34 {strides = array<i32>} : memref<64x128xf32, #tpu.memory_space<vmem>>, vector<64x128xf32>,
    } else {
    }
    %c0 = arith.constant 0 : index
    %c0_1 = arith.constant 0 : index
    %c0_2 = arith.constant 0 : index
    %3 = vector.load %arg2[%c0, %c0_1, %c0_2] : memref<1x64x128xf32, #tpu.memory_space<vmem>>, vector<1x64x128xf32>
    %4 = vector.shape_cast %3 : vector<1x64x128xf32> to vector<64x128xf32>
    %5 = arith.index_cast %arg1 : i32 to index
    %c0_3 = arith.constant 0 : index
    %c0_4 = arith.constant 0 : index
    %6 = vector.load %arg3[%5, %c0_3, %c0_4] : memref<3x128x128xf32, #tpu.memory_space<vmem>>, vector<1x128x128xf32>
    %7 = vector.shape_cast %6 : vector<1x128x128xf32> to vector<128x128xf32>
    %cst = arith.constant dense<0.000000e+00> : vector<64x128xf32>
    %8 = tpu.matmul %4, %7, %cst {dimension_numbers = #tpu.dot_dimension_numbers<[1], [0], [0], [1], [0, 0, 1, 1], [], []>} : vector<64x128xf32>, vector<128x128xf32>, vector<64x128xf32> -> vector<64x128xf32>
    %9 = arith.index_cast %arg1 : i32 to index
    %c0_5 = arith.constant 0 : index
    %c0_6 = arith.constant 0 : index
    %10 = vector.load %arg5[%9, %c0_5, %c0_6] : memref<3x1x128xf32, #tpu.memory_space<vmem>>, vector<1x1x128xf32>
    %11 = vector.shape_cast %10 : vector<1x1x128xf32> to vector<1x128xf32>
    %12 = vector.broadcast %11 : vector<1x128xf32> to vector<64x128xf32>
    %13 = arith.addf %8, %12 : vector<64x128xf32>
    %14 = arith.mulf %13, %13 : vector<64x128xf32>
    %cst_7 = arith.constant dense<0.000000e+00> : vector<64xf32>
    %15 = vector.multi_reduction <add>, %14, %cst_7 [1] : vector<64x128xf32> to vector<64xf32>
    %16 = vector.shape_cast %15 : vector<64xf32> to vector<64x1xf32>
    %cst_8 = arith.constant 1.000000e-24 : f32
    %17 = vector.broadcast %cst_8 : f32 to vector<64x1xf32>
    %18 = arith.maximumf %16, %17 : vector<64x1xf32>
    %19 = math.rsqrt %18 : vector<64x1xf32>
    %20 = vector.broadcast %19 : vector<64x1xf32> to vector<64x128xf32>
    %21 = arith.mulf %13, %20 : vector<64x128xf32>
    %cst_9 = arith.constant 0.000000e+00 : f32
    %22 = vector.broadcast %cst_9 : f32 to vector<64x128xf32>
    %23 = arith.maximumf %21, %22 : vector<64x128xf32>
    %c0_10 = arith.constant 0 : index
    %c0_11 = arith.constant 0 : index
    %24 = vector.load %arg7[%c0_10, %c0_11] : memref<64x128xf32, #tpu.memory_space<vmem>>, vector<64x128xf32>
    %25 = arith.index_cast %arg1 : i32 to index
    %c0_12 = arith.constant 0 : index
    %c0_13 = arith.constant 0 : index
    %26 = vector.load %arg4[%25, %c0_12, %c0_13] : memref<3x128x128xf32, #tpu.memory_space<vmem>>, vector<1x128x128xf32>
    %27 = vector.shape_cast %26 : vector<1x128x128xf32> to vector<128x128xf32>
    %cst_14 = arith.constant dense<0.000000e+00> : vector<64x128xf32>
    %28 = tpu.matmul %23, %27, %cst_14 {dimension_numbers = #tpu.dot_dimension_numbers<[1], [0], [0], [1], [0, 0, 1, 1], [], []>} : vector<64x128xf32>, vector<128x128xf32>, vector<64x128xf32> -> vector<64x128xf32>
    %29 = arith.addf %24, %28 : vector<64x128xf32>
    %c0_15 = arith.constant 0 : index
    %c0_16 = arith.constant 0 : index
    %30 = vector.load %arg7[%c0_15, %c0_16] : memref<64x128xf32, #tpu.memory_space<vmem>>, vector<64x128xf32>
    tpu.vector_store %arg7[%c0_15, %c0_16], %29 {strides = array<i32>} : memref<64x128xf32, #tpu.memory_space<vmem>>, vector<64x128xf32>,
    %c2_i32 = arith.constant 2 : i32
    %31 = arith.cmpi eq, %arg1, %c2_i32 : i32
    %32 = arith.extui %31 : i1 to i32
    %c0_i32_17 = arith.constant 0 : i32
    %33 = arith.cmpi ne, %32, %c0_i32_17 : i32
    scf.if %33 {
      %c0_18 = arith.constant 0 : index
      %c0_19 = arith.constant 0 : index
      %34 = vector.load %arg7[%c0_18, %c0_19] : memref<64x128xf32, #tpu.memory_space<vmem>>, vector<64x128xf32>
      %c0_20 = arith.constant 0 : index
      %c0_21 = arith.constant 0 : index
      %35 = vector.load %arg6[%c0_20, %c0_21] : memref<1x128xf32, #tpu.memory_space<vmem>>, vector<1x128xf32>
      %36 = vector.broadcast %35 : vector<1x128xf32> to vector<64x128xf32>
      %37 = arith.addf %34, %36 : vector<64x128xf32>
      %cst_22 = arith.constant dense<0xFF800000> : vector<64xf32>
      %38 = vector.multi_reduction <maximumf>, %37, %cst_22 [1] : vector<64x128xf32> to vector<64xf32>
      %39 = vector.shape_cast %38 : vector<64xf32> to vector<64x1xf32>
      %40 = vector.broadcast %39 : vector<64x1xf32> to vector<64x128xf32>
      %41 = arith.subf %37, %40 : vector<64x128xf32>
      %42 = math.exp %41 : vector<64x128xf32>
      %cst_23 = arith.constant dense<0.000000e+00> : vector<64xf32>
      %43 = vector.multi_reduction <add>, %42, %cst_23 [1] : vector<64x128xf32> to vector<64xf32>
      %44 = vector.shape_cast %43 : vector<64xf32> to vector<64x1xf32>
      %45 = math.log %44 : vector<64x1xf32>
      %46 = vector.broadcast %45 : vector<64x1xf32> to vector<64x128xf32>
      %47 = arith.subf %41, %46 : vector<64x128xf32>
      %c0_24 = arith.constant 0 : index
      %c0_25 = arith.constant 0 : index
      %48 = vector.load %arg7[%c0_24, %c0_25] : memref<64x128xf32, #tpu.memory_space<vmem>>, vector<64x128xf32>
      tpu.vector_store %arg7[%c0_24, %c0_25], %47 {strides = array<i32>} : memref<64x128xf32, #tpu.memory_space<vmem>>, vector<64x128xf32>,
    } else {
    }
    return
  }
  func.func @transform_0(%arg0: i32, %arg1: i32) -> (i32, i32, i32) {
    %c0_i32 = arith.constant 0 : i32
    %c0_i32_0 = arith.constant 0 : i32
    return %arg1, %arg0, %c0_i32 : i32, i32, i32
  }
  func.func @transform_1(%arg0: i32, %arg1: i32) -> (i32, i32, i32) {
    %c0_i32 = arith.constant 0 : i32
    %c0_i32_0 = arith.constant 0 : i32
    %c0_i32_1 = arith.constant 0 : i32
    %c0_i32_2 = arith.constant 0 : i32
    return %c0_i32, %c0_i32_0, %c0_i32_1 : i32, i32, i32
  }
  func.func @transform_2(%arg0: i32, %arg1: i32) -> (i32, i32, i32) {
    %c0_i32 = arith.constant 0 : i32
    %c0_i32_0 = arith.constant 0 : i32
    %c0_i32_1 = arith.constant 0 : i32
    %c0_i32_2 = arith.constant 0 : i32
    return %c0_i32, %c0_i32_0, %c0_i32_1 : i32, i32, i32
  }
  func.func @transform_3(%arg0: i32, %arg1: i32) -> (i32, i32, i32) {
    %c0_i32 = arith.constant 0 : i32
    %c0_i32_0 = arith.constant 0 : i32
    %c0_i32_1 = arith.constant 0 : i32
    %c0_i32_2 = arith.constant 0 : i32
    return %c0_i32, %c0_i32_0, %c0_i32_1 : i32, i32, i32
  }
  func.func @transform_4(%arg0: i32, %arg1: i32) -> (i32, i32) {
    %c0_i32 = arith.constant 0 : i32
    %c0_i32_0 = arith.constant 0 : i32
    %c0_i32_1 = arith.constant 0 : i32
    return %c0_i32, %c0_i32_0 : i32, i32
  }
  func.func @transform_5(%arg0: i32, %arg1: i32) -> (i32, i32) {
    %c0_i32 = arith.constant 0 : i32
    %c0_i32_0 = arith.constant 0 : i32
    return %arg0, %c0_i32 : i32, i32
  }
}

</mosaic_0001>

<llo_original>
// kernel: tpu_custom_call.1
$region0: #{tpu_custom_call.1}
  #allocation0 [shape = 'u32[]', space=smem, size = 0x4, offset = 0x4, fixed_abs, tag = 'smem constant byte address 0x4 - core index']
  #allocation1 [shape = 'u32[144,128]{1,0:T(1,128)}', space=vmem, size = 0x12000, scoped, tag = 'internal scratch']
  %s0 = inlined_call_operand.hbm [shape: f32[3,64,128], index: 0, kind: input, shape index: {}]
  %s1 = inlined_call_operand.hbm [shape: f32[3,128,128], index: 1, kind: input, shape index: {}]
  %s2 = inlined_call_operand.hbm [shape: f32[3,128,128], index: 2, kind: input, shape index: {}]
  %s3 = inlined_call_operand.vmem [shape: f32[3,1,128], index: 3, kind: input, shape index: {}]
  %s4 = inlined_call_operand.vmem [shape: f32[1,128], index: 4, kind: input, shape index: {}]
  %s5 = inlined_call_operand.hbm [shape: f32[64,128], index: 5, kind: output, shape index: {}]
  %s6 = sld [smem:[#allocation0]]
  $region73: #{tpu_custom_call.1} parent=0
    _
  %s8 = ssub.s32 1, %s6
  %s9 = scalar_select 0, %s8, %s6
  $region1: #{tpu_custom_call.1} parent=0
    #allocation2 [shape = 'u8[65536]{0}', space=vmem, size = 0x10000, scoped, tag = 'input window, operand 0']
    #allocation3 [shape = 's32[2]{0}', space=sflag, size = 0x8, scoped, tag = 'scoped memory for tpu_custom_call.1']
    #allocation4 [shape = 's32[2]{0}', space=sflag, size = 0x8, scoped, tag = 'scoped memory for tpu_custom_call.1']
    #allocation5 [shape = 'u8[196608]{0}', space=vmem, size = 0x30000, scoped, tag = 'input window, operand 1, single buffered']
    #allocation6 [shape = 's32[1]{0}', space=sflag, size = 0x4, scoped, tag = 'scoped memory for tpu_custom_call.1']
    #allocation7 [shape = 'u8[196608]{0}', space=vmem, size = 0x30000, scoped, tag = 'input window, operand 2, single buffered']
    #allocation8 [shape = 'u8[32768]{0}', space=vmem, size = 0x8000, scoped, tag = 'output window, operand 0, single buffered']
    %10 = vsyncpa [#allocation3], 0
    %s11 = scalar_lea.sflag [#allocation3], 1
    %12 = vsyncpa %s11, 0
    %13 = vsyncpa [#allocation6], 0
    %14 = vsyncpa [#allocation4], 0
    loop: start=0, step=1, limit=5
    $region2: #{tpu_custom_call.1} parent=1 // loop_pre_header
      _
    $region3: #{tpu_custom_call.1} parent=1 // loop_header
      %s16 = sphi 0, %s20
      %p17 = scmp.ge.s32.totalorder %s16, 5
      %s23 = sphi 0, %s35
      %s24 = sphi 0, %s31
      %s25 = sphi 0, %s23
      %s26 = sphi 0, %s24
      %s27 = sphi 0, %s25
      %s28 = sphi 0, %s26
      %s40 = sphi 0, %s42
      %s43 = sphi 0, %s40
      %s44 = sphi 0, %s43
      %s60 = sphi 0, %s44
      %s64 = sphi 0, %s64
      %s66 = sphi 0, %s64
      %s67 = sphi 0, %s66
      %s81 = sphi 0, %s67
      %s85 = sphi 0, %s85
      %s87 = sphi 0, %s85
      %s88 = sphi 0, %s87
      %s102 = sphi 0, %s88
      %s106 = sphi 0, %s106
      %s108 = sphi 0, %s106
      %s109 = sphi 0, %s108
      %s123 = sphi 0, %s109
      %s127 = sphi 0, %s127
      %s129 = sphi 0, %s127
      %s130 = sphi 0, %s129
      %s144 = sphi 0, %s130
      %s150 = sphi 0, %s152
      %s153 = sphi 0, %s150
      %s154 = sphi 0, %s153
      %s170 = sphi 0, %s154
    $region4: #{tpu_custom_call.1} parent=1 // loop_header_branch
      %19 = sbr.rel (%p17) target = $region8
    $region5: #{tpu_custom_call.1} parent=1 // loop_body
      %s21 = ssub.s32 %s16, 1
      %s22 = ssub.s32 %s16, 2
      %s29 = sadd.s32 1, %s24
      %p30 = scmp.ge.s32.totalorder %s29, 3
      %s31 = scalar_select %p30, 0, %s29
      %s32 = sadd.s32 1, %s23
      %s33 = scalar_select %p30, %s32, %s23
      %p34 = scmp.ge.s32.totalorder %s33, 1
      %s35 = scalar_select %p34, 0, %s33
      %s36 = ssub.s32 %s24, %s31
      %s37 = ssub.s32 %s23, %s35
      %s38 = sor.u32 %s36, %s37
      %p39 = scmp.eq.s32.totalorder %s38, 0
      %s41 = sadd.s32 %s40, 1
      %s42 = scalar_select %p39, %s40, %s41
      %p45 = pneg %p39
      %p46 = scmp.eq.s32.totalorder %s16, 2
      %p47 = por %p45, %p46
      %p48 = scmp.ne.s32.totalorder %s40, %s43
      %p49 = scmp.eq.s32.totalorder %s16, 0
      %p50 = por %p48, %p49
      %p51 = scmp.ne.s32.totalorder %s40, %s43
      %p52 = scmp.eq.s32.totalorder %s21, 2
      %p53 = por %p51, %p52
      %p54 = scmp.ne.s32.totalorder %s43, %s44
      %p55 = scmp.eq.s32.totalorder %s21, 0
      %p56 = por %p54, %p55
      %p57 = scmp.ne.s32.totalorder %s43, %s44
      %p58 = scmp.eq.s32.totalorder %s22, 2
      %p59 = por %p57, %p58
      %p61 = scmp.ne.s32.totalorder %s44, %s60
      %p62 = scmp.eq.s32.totalorder %s22, 0
      %p63 = por %p61, %p62
      %s65 = sadd.s32 %s64, 1
      %p68 = scmp.eq.s32.totalorder %s16, 2
      %p69 = scmp.ne.s32.totalorder %s64, %s66
      %p70 = scmp.eq.s32.totalorder %s16, 0
      %p71 = por %p69, %p70
      %p72 = scmp.ne.s32.totalorder %s64, %s66
      %p73 = scmp.eq.s32.totalorder %s21, 2
      %p74 = por %p72, %p73
      %p75 = scmp.ne.s32.totalorder %s66, %s67
      %p76 = scmp.eq.s32.totalorder %s21, 0
      %p77 = por %p75, %p76
      %p78 = scmp.ne.s32.totalorder %s66, %s67
      %p79 = scmp.eq.s32.totalorder %s22, 2
      %p80 = por %p78, %p79
      %p82 = scmp.ne.s32.totalorder %s67, %s81
      %p83 = scmp.eq.s32.totalorder %s22, 0
      %p84 = por %p82, %p83
      %s86 = sadd.s32 %s85, 1
      %p89 = scmp.eq.s32.totalorder %s16, 2
      %p90 = scmp.ne.s32.totalorder %s85, %s87
      %p91 = scmp.eq.s32.totalorder %s16, 0
      %p92 = por %p90, %p91
      %p93 = scmp.ne.s32.totalorder %s85, %s87
      %p94 = scmp.eq.s32.totalorder %s21, 2
      %p95 = por %p93, %p94
      %p96 = scmp.ne.s32.totalorder %s87, %s88
      %p97 = scmp.eq.s32.totalorder %s21, 0
      %p98 = por %p96, %p97
      %p99 = scmp.ne.s32.totalorder %s87, %s88
      %p100 = scmp.eq.s32.totalorder %s22, 2
      %p101 = por %p99, %p100
      %p103 = scmp.ne.s32.totalorder %s88, %s102
      %p104 = scmp.eq.s32.totalorder %s22, 0
      %p105 = por %p103, %p104
      %s107 = sadd.s32 %s106, 1
      %p110 = scmp.eq.s32.totalorder %s16, 2
      %p111 = scmp.ne.s32.totalorder %s106, %s108
      %p112 = scmp.eq.s32.totalorder %s16, 0
      %p113 = por %p111, %p112
      %p114 = scmp.ne.s32.totalorder %s106, %s108
      %p115 = scmp.eq.s32.totalorder %s21, 2
      %p116 = por %p114, %p115
      %p117 = scmp.ne.s32.totalorder %s108, %s109
      %p118 = scmp.eq.s32.totalorder %s21, 0
      %p119 = por %p117, %p118
      %p120 = scmp.ne.s32.totalorder %s108, %s109
      %p121 = scmp.eq.s32.totalorder %s22, 2
      %p122 = por %p120, %p121
      %p124 = scmp.ne.s32.totalorder %s109, %s123
      %p125 = scmp.eq.s32.totalorder %s22, 0
      %p126 = por %p124, %p125
      %s128 = sadd.s32 %s127, 1
      %p131 = scmp.eq.s32.totalorder %s16, 2
      %p132 = scmp.ne.s32.totalorder %s127, %s129
      %p133 = scmp.eq.s32.totalorder %s16, 0
      %p134 = por %p132, %p133
      %p135 = scmp.ne.s32.totalorder %s127, %s129
      %p136 = scmp.eq.s32.totalorder %s21, 2
      %p137 = por %p135, %p136
      %p138 = scmp.ne.s32.totalorder %s129, %s130
      %p139 = scmp.eq.s32.totalorder %s21, 0
      %p140 = por %p138, %p139
      %p141 = scmp.ne.s32.totalorder %s129, %s130
      %p142 = scmp.eq.s32.totalorder %s22, 2
      %p143 = por %p141, %p142
      %p145 = scmp.ne.s32.totalorder %s130, %s144
      %p146 = scmp.eq.s32.totalorder %s22, 0
      %p147 = por %p145, %p146
      %s148 = ssub.s32 %s23, %s35
      %p149 = scmp.eq.s32.totalorder %s148, 0
      %s151 = sadd.s32 %s150, 1
      %s152 = scalar_select %p149, %s150, %s151
      %p155 = pneg %p149
      %p156 = scmp.eq.s32.totalorder %s16, 2
      %p157 = por %p155, %p156
      %p158 = scmp.ne.s32.totalorder %s150, %s153
      %p159 = scmp.eq.s32.totalorder %s16, 0
      %p160 = por %p158, %p159
      %p161 = scmp.ne.s32.totalorder %s150, %s153
      %p162 = scmp.eq.s32.totalorder %s21, 2
      %p163 = por %p161, %p162
      %p164 = scmp.ne.s32.totalorder %s153, %s154
      %p165 = scmp.eq.s32.totalorder %s21, 0
      %p166 = por %p164, %p165
      %p167 = scmp.ne.s32.totalorder %s153, %s154
      %p168 = scmp.eq.s32.totalorder %s22, 2
      %p169 = por %p167, %p168
      %p171 = scmp.ne.s32.totalorder %s154, %s170
      %p172 = scmp.eq.s32.totalorder %s22, 0
      %p173 = por %p171, %p172
      %p174 = scmp.le.s32.totalorder 1, %s16
      %p175 = scmp.lt.s32.totalorder %s16, 4
      %p176 = pnand %p174, %p175
      %p177 = pneg %p176
      // Predicated region
      $region9: #{tpu_custom_call.1} parent=5 // pred_check
        _
      $region10: #{tpu_custom_call.1} parent=5 // pred_check_branch
        %179 = sbr.rel (%p176) target = $region12
      $region11: #{tpu_custom_call.1} parent=5 // pred_region
        %s180 = ssub.s32 %s16, 1
        // Predicated region
        $region13: #{tpu_custom_call.1} parent=11 // pred_check
          %p181 = pneg %p77
        $region14: #{tpu_custom_call.1} parent=11 // pred_check_branch
          %183 = sbr.rel (%p181) target = $region16
        $region15: #{tpu_custom_call.1} parent=11 // pred_region
          %s185 = ssub.s32 6144, 6144
          %186 = vsyncadd [#allocation6], %s185
          %s187 = sshll.u32 [#allocation5], 4
          %s188 = int_to_ptr.vmem [resolvable:$true] %s187
          %193 = dma.hbm_to_vmem [thread:$0]  %s1, 6144, %s188, [#allocation6], 128, 128, 8
        $region16: #{tpu_custom_call.1} parent=11 // pred_fallthru
          _
        // Predicated region
        $region17: #{tpu_custom_call.1} parent=11 // pred_check
          %p194 = pneg %p98
        $region18: #{tpu_custom_call.1} parent=11 // pred_check_branch
          %196 = sbr.rel (%p194) target = $region20
        $region19: #{tpu_custom_call.1} parent=11 // pred_region
          %s198 = ssub.s32 6144, 6144
          %199 = vsyncadd [#allocation6], %s198
          %s200 = sshll.u32 [#allocation7], 4
          %s201 = int_to_ptr.vmem [resolvable:$true] %s200
          %206 = dma.hbm_to_vmem [thread:$0]  %s2, 6144, %s201, [#allocation6], 128, 128, 8
        $region20: #{tpu_custom_call.1} parent=11 // pred_fallthru
          _
        // Predicated region
        $region21: #{tpu_custom_call.1} parent=11 // pred_check
          %p207 = pneg %p119
        $region22: #{tpu_custom_call.1} parent=11 // pred_check_branch
          %209 = sbr.rel (%p207) target = $region24
        $region23: #{tpu_custom_call.1} parent=11 // pred_region
          _
        $region24: #{tpu_custom_call.1} parent=11 // pred_fallthru
          _
        // Predicated region
        $region25: #{tpu_custom_call.1} parent=11 // pred_check
          %p210 = pneg %p140
        $region26: #{tpu_custom_call.1} parent=11 // pred_check_branch
          %212 = sbr.rel (%p210) target = $region28
        $region27: #{tpu_custom_call.1} parent=11 // pred_region
          _
        $region28: #{tpu_custom_call.1} parent=11 // pred_fallthru
          _
      $region12: #{tpu_custom_call.1} parent=5 // pred_fallthru
        _
      %p213 = scmp.lt.s32.totalorder %s16, 3
      // Predicated region
      $region29: #{tpu_custom_call.1} parent=5 // pred_check
        %p214 = pneg %p213
      $region30: #{tpu_custom_call.1} parent=5 // pred_check_branch
        %216 = sbr.rel (%p214) target = $region32
      $region31: #{tpu_custom_call.1} parent=5 // pred_region
        // Predicated region
        $region33: #{tpu_custom_call.1} parent=31 // pred_check
          %p217 = pneg %p50
        $region34: #{tpu_custom_call.1} parent=31 // pred_check_branch
          %219 = sbr.rel (%p217) target = $region36
        $region35: #{tpu_custom_call.1} parent=31 // pred_region
          %s220 = sand.u32 %s40, 1
          %s221 = scalar_lea.sflag [#allocation3], %s220
          %s222 = sand.u32 %s40, 1
          %s223 = smul.addr %s222, 64
          %s224 = scalar_lea.vmem [#allocation2], %s223
          %s225 = smul.u32 8, %s23
          %s227 = ssub.s32 1024, 1024
          %228 = vsyncadd %s221, %s227
          %s229 = smul.addr %s24, 8
          %s230 = sadd.s32 %s225, %s229
          %s231 = smul.addr %s230, 128
          %s232 = scalar_lea.hbm %s0, %s231
          %s233 = sshll.u32 %s224, 4
          %s234 = int_to_ptr.vmem [resolvable:$true] %s233
          %239 = dma.hbm_to_vmem [thread:$0]  %s232, 1024, %s234, %s221, 128, 128, 8
        $region36: #{tpu_custom_call.1} parent=31 // pred_fallthru
          _
      $region32: #{tpu_custom_call.1} parent=5 // pred_fallthru
        _
      %p240 = scmp.le.s32.totalorder 1, %s16
      %p241 = scmp.lt.s32.totalorder %s16, 4
      %p242 = pnand %p240, %p241
      %p243 = pneg %p242
      // Predicated region
      $region37: #{tpu_custom_call.1} parent=5 // pred_check
        _
      $region38: #{tpu_custom_call.1} parent=5 // pred_check_branch
        %245 = sbr.rel (%p242) target = $region40
      $region39: #{tpu_custom_call.1} parent=5 // pred_region
        %s246 = ssub.s32 %s16, 1
        %s247 = sand.u32 %s43, 1
        %s248 = scalar_lea.sflag [#allocation3], %s247
        %s249 = sand.u32 %s43, 1
        %s250 = smul.addr %s249, 64
        %s251 = scalar_lea.vmem [#allocation2], %s250
        // Predicated region
        $region41: #{tpu_custom_call.1} parent=39 // pred_check
          %p252 = pneg %p56
        $region42: #{tpu_custom_call.1} parent=39 // pred_check_branch
          %254 = sbr.rel (%p252) target = $region44
        $region43: #{tpu_custom_call.1} parent=39 // pred_region
          %255 = dma.done %s248, 1024
        $region44: #{tpu_custom_call.1} parent=39 // pred_fallthru
          _
        // Predicated region
        $region45: #{tpu_custom_call.1} parent=39 // pred_check
          %p256 = pneg %p77
        $region46: #{tpu_custom_call.1} parent=39 // pred_check_branch
          %258 = sbr.rel (%p256) target = $region48
        $region47: #{tpu_custom_call.1} parent=39 // pred_region
          %259 = dma.done [#allocation6], 6144
        $region48: #{tpu_custom_call.1} parent=39 // pred_fallthru
          _
        // Predicated region
        $region49: #{tpu_custom_call.1} parent=39 // pred_check
          %p260 = pneg %p98
        $region50: #{tpu_custom_call.1} parent=39 // pred_check_branch
          %262 = sbr.rel (%p260) target = $region52
        $region51: #{tpu_custom_call.1} parent=39 // pred_region
          %263 = dma.done [#allocation6], 6144
        $region52: #{tpu_custom_call.1} parent=39 // pred_fallthru
          _
        %s264 = sand.u32 %s43, 1
        %s265 = scalar_lea.sflag [#allocation3], %s264
        %s266 = sand.u32 %s43, 1
        %s267 = smul.addr %s266, 64
        %s268 = scalar_lea.vmem [#allocation2], %s267
        %p269 = pneg %p56
        %p270 = pneg %p53
        %p271 = pneg %p77
        %p272 = pneg %p74
        %p273 = pneg %p98
        %p274 = pneg %p95
        %p275 = pneg %p119
        %p276 = pneg %p116
        %p277 = pneg %p140
        %p278 = pneg %p137
        %p279 = pneg %p166
        %p280 = pneg %p163
        %s281 = smul.u32 8, %s25
        %s282 = smul.u32 8, %s25
        %p283 = scmp.eq.s32.totalorder %s26, 0
        // Predicated region
        $region53: #{tpu_custom_call.1} parent=39 // pred_check
          %p284 = pneg %p283
        $region54: #{tpu_custom_call.1} parent=39 // pred_check_branch
          %286 = sbr.rel (%p284) target = $region56
        $region55: #{tpu_custom_call.1} parent=39 // pred_region
          %287 = vst [vmem:[#allocation8] sm:$0xff] 0.0
          %288 = vst [vmem:[#allocation8 + $0x8] sm:$0xff] 0.0
          %289 = vst [vmem:[#allocation8 + $0x10] sm:$0xff] 0.0
          %290 = vst [vmem:[#allocation8 + $0x18] sm:$0xff] 0.0
          %291 = vst [vmem:[#allocation8 + $0x20] sm:$0xff] 0.0
          %292 = vst [vmem:[#allocation8 + $0x28] sm:$0xff] 0.0
          %293 = vst [vmem:[#allocation8 + $0x30] sm:$0xff] 0.0
          %294 = vst [vmem:[#allocation8 + $0x38] sm:$0xff] 0.0
        $region56: #{tpu_custom_call.1} parent=39 // pred_fallthru
          _
        %v295 = vld [vmem:[%s251] sm:$0xff]
        %v296 = vld [vmem:[%s251 + $0x8] sm:$0xff]
        %v297 = vld [vmem:[%s251 + $0x10] sm:$0xff]
        %v298 = vld [vmem:[%s251 + $0x18] sm:$0xff]
        %v299 = vld [vmem:[%s251 + $0x20] sm:$0xff]
        %v300 = vld [vmem:[%s251 + $0x28] sm:$0xff]
        %v301 = vld [vmem:[%s251 + $0x30] sm:$0xff]
        %v302 = vld [vmem:[%s251 + $0x38] sm:$0xff]
        %s303 = smul.u32 %s26, 128
        %s304 = scalar_lea.vmem [#allocation5], %s303
        %v305 = vld [vmem:[%s304] sm:$0xff]
        %v306 = vld [vmem:[%s304 + $0x8] sm:$0xff]
        %v307 = vld [vmem:[%s304 + $0x10] sm:$0xff]
        %v308 = vld [vmem:[%s304 + $0x18] sm:$0xff]
        %v309 = vld [vmem:[%s304 + $0x20] sm:$0xff]
        %v310 = vld [vmem:[%s304 + $0x28] sm:$0xff]
        %v311 = vld [vmem:[%s304 + $0x30] sm:$0xff]
        %v312 = vld [vmem:[%s304 + $0x38] sm:$0xff]
        %v313 = vld [vmem:[%s304 + $0x40] sm:$0xff]
        %v314 = vld [vmem:[%s304 + $0x48] sm:$0xff]
        %v315 = vld [vmem:[%s304 + $0x50] sm:$0xff]
        %v316 = vld [vmem:[%s304 + $0x58] sm:$0xff]
        %v317 = vld [vmem:[%s304 + $0x60] sm:$0xff]
        %v318 = vld [vmem:[%s304 + $0x68] sm:$0xff]
        %v319 = vld [vmem:[%s304 + $0x70] sm:$0xff]
        %v320 = vld [vmem:[%s304 + $0x78] sm:$0xff]
        %s321 = scalar_lea.vmem %s3, %s26
        %v322 = vld [vmem:[%s321] sm:$0x1]
        %v324 = vlaneseq
        %v325 = vshrl.u32 %v324, 7
        %v326 = vsub.s32 0, %v325
        %v327 = vrot.slane %v322, %v326
        %329 = vmatprep.subr.mxu0 0.0
        %330 = vmatpush1.msra.mxu0 %v305
        %331 = vmatprep.subr.mxu0 0.0
        %332 = vmatpush1.msra.mxu0 %v306
        %333 = vmatprep.subr.mxu0 0.0
        %334 = vmatpush1.msra.mxu0 %v307
        %335 = vmatprep.subr.mxu0 0.0
        %336 = vmatpush1.msra.mxu0 %v308
        %337 = vmatprep.subr.mxu0 0.0
        %338 = vmatpush1.msra.mxu0 %v309
        %339 = vmatprep.subr.mxu0 0.0
        %340 = vmatpush1.msra.mxu0 %v310
        %341 = vmatprep.subr.mxu0 0.0
        %342 = vmatpush1.msra.mxu0 %v311
        %343 = vmatprep.subr.mxu0 0.0
        %344 = vmatpush1.msra.mxu0 %v312
        %345 = vmatprep.subr.mxu0 0.0
        %346 = vmatpush1.msra.mxu0 %v313
        %347 = vmatprep.subr.mxu0 0.0
        %348 = vmatpush1.msra.mxu0 %v314
        %349 = vmatprep.subr.mxu0 0.0
        %350 = vmatpush1.msra.mxu0 %v315
        %351 = vmatprep.subr.mxu0 0.0
        %352 = vmatpush1.msra.mxu0 %v316
        %353 = vmatprep.subr.mxu0 0.0
        %354 = vmatpush1.msra.mxu0 %v317
        %355 = vmatprep.subr.mxu0 0.0
        %356 = vmatpush1.msra.mxu0 %v318
        %357 = vmatprep.subr.mxu0 0.0
        %358 = vmatpush1.msra.mxu0 %v319
        %359 = vmatprep.subr.mxu0 0.0
        %360 = vmatpush1.msra.mxu0 %v320
        %361 = vmatprep.subr.mxu0 0.0
        %362 = vmatpush1.msra.mxu0 0.0
        %363 = vmatprep.subr.mxu0 0.0
        %364 = vmatpush1.msra.mxu0 0.0
        %365 = vmatprep.subr.mxu0 0.0
        %366 = vmatpush1.msra.mxu0 0.0
        %367 = vmatprep.subr.mxu0 0.0
        %368 = vmatpush1.msra.mxu0 0.0
        %369 = vmatprep.subr.mxu0 0.0
        %370 = vmatpush1.msra.mxu0 0.0
        %371 = vmatprep.subr.mxu0 0.0
        %372 = vmatpush1.msra.mxu0 0.0
        %373 = vmatprep.subr.mxu0 0.0
        %374 = vmatpush1.msra.mxu0 0.0
        %375 = vmatprep.subr.mxu0 0.0
        %376 = vmatpush1.msra.mxu0 0.0
        %377 = vmatprep.subr.mxu0 0.0
        %378 = vmatpush1.msra.mxu0 0.0
        %379 = vmatprep.subr.mxu0 0.0
        %380 = vmatpush1.msra.mxu0 0.0
        %381 = vmatprep.subr.mxu0 0.0
        %382 = vmatpush1.msra.mxu0 0.0
        %383 = vmatprep.subr.mxu0 0.0
        %384 = vmatpush1.msra.mxu0 0.0
        %385 = vmatprep.subr.mxu0 0.0
        %386 = vmatpush1.msra.mxu0 0.0
        %387 = vmatprep.subr.mxu0 0.0
        %388 = vmatpush1.msra.mxu0 0.0
        %389 = vmatprep.subr.mxu0 0.0
        %390 = vmatpush1.msra.mxu0 0.0
        %391 = vmatprep.subr.mxu0 0.0
        %392 = vmatpush1.msra.mxu0 0.0
        %393 = vmatprep.mubr.f32.mxu0 0.0
        %394 = vmatmul.mubr.f32.gmra.mrb[0].mxu0 %v295
        %v395 = vpop.f32.mrb[0].mxu0
        %v396 = vadd.f32 %v327, %v395
        %v397 = vpop.f32.mrb[0].mxu0
        %398 = vmatprep.mubr.f32.mxu0 0.0
        %399 = vmatmul.mubr.f32.gmra.mrb[0].mxu0 %v296
        %v400 = vpop.f32.mrb[0].mxu0
        %v401 = vadd.f32 %v327, %v400
        %v402 = vpop.f32.mrb[0].mxu0
        %403 = vmatprep.mubr.f32.mxu0 0.0
        %404 = vmatmul.mubr.f32.gmra.mrb[0].mxu0 %v297
        %v405 = vpop.f32.mrb[0].mxu0
        %v406 = vadd.f32 %v327, %v405
        %v407 = vpop.f32.mrb[0].mxu0
        %408 = vmatprep.mubr.f32.mxu0 0.0
        %409 = vmatmul.mubr.f32.gmra.mrb[0].mxu0 %v298
        %v410 = vpop.f32.mrb[0].mxu0
        %v411 = vadd.f32 %v327, %v410
        %v412 = vpop.f32.mrb[0].mxu0
        %413 = vmatprep.mubr.f32.mxu0 0.0
        %414 = vmatmul.mubr.f32.gmra.mrb[0].mxu0 %v299
        %v415 = vpop.f32.mrb[0].mxu0
        %v416 = vadd.f32 %v327, %v415
        %v417 = vpop.f32.mrb[0].mxu0
        %418 = vmatprep.mubr.f32.mxu0 0.0
        %419 = vmatmul.mubr.f32.gmra.mrb[0].mxu0 %v300
        %v420 = vpop.f32.mrb[0].mxu0
        %v421 = vadd.f32 %v327, %v420
        %v422 = vpop.f32.mrb[0].mxu0
        %423 = vmatprep.mubr.f32.mxu0 0.0
        %424 = vmatmul.mubr.f32.gmra.mrb[0].mxu0 %v301
        %v425 = vpop.f32.mrb[0].mxu0
        %v426 = vadd.f32 %v327, %v425
        %v427 = vpop.f32.mrb[0].mxu0
        %428 = vmatprep.mubr.f32.mxu0 0.0
        %429 = vmatmul.mubr.f32.gmra.mrb[0].mxu0 %v302
        %v430 = vpop.f32.mrb[0].mxu0
        %v431 = vadd.f32 %v327, %v430
        %v432 = vpop.f32.mrb[0].mxu0
        %433 = vdwg.mxu0
        %v434 = vmul.f32 %v396, %v396
        %v435 = vmul.f32 %v401, %v401
        %v436 = vmul.f32 %v406, %v406
        %v437 = vmul.f32 %v411, %v411
        %v438 = vmul.f32 %v416, %v416
        %v439 = vmul.f32 %v421, %v421
        %v440 = vmul.f32 %v426, %v426
        %v441 = vmul.f32 %v431, %v431
        %442 = vadd.xlane.f32.xlu0 %v434
        %v443 = vpop.xlane.xlu0 %442
        %444 = vadd.xlane.f32.xlu0 %v435
        %v445 = vpop.xlane.xlu0 %444
        %446 = vadd.xlane.f32.xlu0 %v436
        %v447 = vpop.xlane.xlu0 %446
        %448 = vadd.xlane.f32.xlu0 %v437
        %v449 = vpop.xlane.xlu0 %448
        %450 = vadd.xlane.f32.xlu0 %v438
        %v451 = vpop.xlane.xlu0 %450
        %452 = vadd.xlane.f32.xlu0 %v439
        %v453 = vpop.xlane.xlu0 %452
        %454 = vadd.xlane.f32.xlu0 %v440
        %v455 = vpop.xlane.xlu0 %454
        %456 = vadd.xlane.f32.xlu0 %v441
        %v457 = vpop.xlane.xlu0 %456
        %v458 = vmax.f32 %v443, 1e-24
        %v459 = vmax.f32 %v445, 1e-24
        %v460 = vmax.f32 %v447, 1e-24
        %v461 = vmax.f32 %v449, 1e-24
        %v462 = vmax.f32 %v451, 1e-24
        %v463 = vmax.f32 %v453, 1e-24
        %v464 = vmax.f32 %v455, 1e-24
        %v465 = vmax.f32 %v457, 1e-24
        %v466 = vrsqrt.pop %v458
        %v467 = vrsqrt.pop %v459
        %v468 = vrsqrt.pop %v460
        %v469 = vrsqrt.pop %v461
        %v470 = vrsqrt.pop %v462
        %v471 = vrsqrt.pop %v463
        %v472 = vrsqrt.pop %v464
        %v473 = vrsqrt.pop %v465
        %v474 = vmul.f32 %v396, %v466
        %v475 = vmul.f32 %v401, %v467
        %v476 = vmul.f32 %v406, %v468
        %v477 = vmul.f32 %v411, %v469
        %v478 = vmul.f32 %v416, %v470
        %v479 = vmul.f32 %v421, %v471
        %v480 = vmul.f32 %v426, %v472
        %v481 = vmul.f32 %v431, %v473
        %v482 = vmax.f32 %v474, 0.0
        %v483 = vmax.f32 %v475, 0.0
        %v484 = vmax.f32 %v476, 0.0
        %v485 = vmax.f32 %v477, 0.0
        %v486 = vmax.f32 %v478, 0.0
        %v487 = vmax.f32 %v479, 0.0
        %v488 = vmax.f32 %v480, 0.0
        %v489 = vmax.f32 %v481, 0.0
        %v490 = vld [vmem:[#allocation8] sm:$0xff]
        %v491 = vld [vmem:[#allocation8 + $0x8] sm:$0xff]
        %v492 = vld [vmem:[#allocation8 + $0x10] sm:$0xff]
        %v493 = vld [vmem:[#allocation8 + $0x18] sm:$0xff]
        %v494 = vld [vmem:[#allocation8 + $0x20] sm:$0xff]
        %v495 = vld [vmem:[#allocation8 + $0x28] sm:$0xff]
        %v496 = vld [vmem:[#allocation8 + $0x30] sm:$0xff]
        %v497 = vld [vmem:[#allocation8 + $0x38] sm:$0xff]
        %s498 = scalar_lea.vmem [#allocation7], %s303
        %v499 = vld [vmem:[%s498] sm:$0xff]
        %v500 = vld [vmem:[%s498 + $0x8] sm:$0xff]
        %v501 = vld [vmem:[%s498 + $0x10] sm:$0xff]
        %v502 = vld [vmem:[%s498 + $0x18] sm:$0xff]
        %v503 = vld [vmem:[%s498 + $0x20] sm:$0xff]
        %v504 = vld [vmem:[%s498 + $0x28] sm:$0xff]
        %v505 = vld [vmem:[%s498 + $0x30] sm:$0xff]
        %v506 = vld [vmem:[%s498 + $0x38] sm:$0xff]
        %v507 = vld [vmem:[%s498 + $0x40] sm:$0xff]
        %v508 = vld [vmem:[%s498 + $0x48] sm:$0xff]
        %v509 = vld [vmem:[%s498 + $0x50] sm:$0xff]
        %v510 = vld [vmem:[%s498 + $0x58] sm:$0xff]
        %v511 = vld [vmem:[%s498 + $0x60] sm:$0xff]
        %v512 = vld [vmem:[%s498 + $0x68] sm:$0xff]
        %v513 = vld [vmem:[%s498 + $0x70] sm:$0xff]
        %v514 = vld [vmem:[%s498 + $0x78] sm:$0xff]
        %515 = vmatprep.subr.mxu0 0.0
        %516 = vmatpush1.msra.mxu0 %v499
        %517 = vmatprep.subr.mxu0 0.0
        %518 = vmatpush1.msra.mxu0 %v500
        %519 = vmatprep.subr.mxu0 0.0
        %520 = vmatpush1.msra.mxu0 %v501
        %521 = vmatprep.subr.mxu0 0.0
        %522 = vmatpush1.msra.mxu0 %v502
        %523 = vmatprep.subr.mxu0 0.0
        %524 = vmatpush1.msra.mxu0 %v503
        %525 = vmatprep.subr.mxu0 0.0
        %526 = vmatpush1.msra.mxu0 %v504
        %527 = vmatprep.subr.mxu0 0.0
        %528 = vmatpush1.msra.mxu0 %v505
        %529 = vmatprep.subr.mxu0 0.0
        %530 = vmatpush1.msra.mxu0 %v506
        %531 = vmatprep.subr.mxu0 0.0
        %532 = vmatpush1.msra.mxu0 %v507
        %533 = vmatprep.subr.mxu0 0.0
        %534 = vmatpush1.msra.mxu0 %v508
        %535 = vmatprep.subr.mxu0 0.0
        %536 = vmatpush1.msra.mxu0 %v509
        %537 = vmatprep.subr.mxu0 0.0
        %538 = vmatpush1.msra.mxu0 %v510
        %539 = vmatprep.subr.mxu0 0.0
        %540 = vmatpush1.msra.mxu0 %v511
        %541 = vmatprep.subr.mxu0 0.0
        %542 = vmatpush1.msra.mxu0 %v512
        %543 = vmatprep.subr.mxu0 0.0
        %544 = vmatpush1.msra.mxu0 %v513
        %545 = vmatprep.subr.mxu0 0.0
        %546 = vmatpush1.msra.mxu0 %v514
        %547 = vmatprep.subr.mxu0 0.0
        %548 = vmatpush1.msra.mxu0 0.0
        %549 = vmatprep.subr.mxu0 0.0
        %550 = vmatpush1.msra.mxu0 0.0
        %551 = vmatprep.subr.mxu0 0.0
        %552 = vmatpush1.msra.mxu0 0.0
        %553 = vmatprep.subr.mxu0 0.0
        %554 = vmatpush1.msra.mxu0 0.0
        %555 = vmatprep.subr.mxu0 0.0
        %556 = vmatpush1.msra.mxu0 0.0
        %557 = vmatprep.subr.mxu0 0.0
        %558 = vmatpush1.msra.mxu0 0.0
        %559 = vmatprep.subr.mxu0 0.0
        %560 = vmatpush1.msra.mxu0 0.0
        %561 = vmatprep.subr.mxu0 0.0
        %562 = vmatpush1.msra.mxu0 0.0
        %563 = vmatprep.subr.mxu0 0.0
        %564 = vmatpush1.msra.mxu0 0.0
        %565 = vmatprep.subr.mxu0 0.0
        %566 = vmatpush1.msra.mxu0 0.0
        %567 = vmatprep.subr.mxu0 0.0
        %568 = vmatpush1.msra.mxu0 0.0
        %569 = vmatprep.subr.mxu0 0.0
        %570 = vmatpush1.msra.mxu0 0.0
        %571 = vmatprep.subr.mxu0 0.0
        %572 = vmatpush1.msra.mxu0 0.0
        %573 = vmatprep.subr.mxu0 0.0
        %574 = vmatpush1.msra.mxu0 0.0
        %575 = vmatprep.subr.mxu0 0.0
        %576 = vmatpush1.msra.mxu0 0.0
        %577 = vmatprep.subr.mxu0 0.0
        %578 = vmatpush1.msra.mxu0 0.0
        %579 = vmatprep.mubr.f32.mxu0 0.0
        %580 = vmatmul.mubr.f32.gmra.mrb[0].mxu0 %v482
        %v581 = vpop.f32.mrb[0].mxu0
        %v582 = vadd.f32 0.0, %v581
        %v583 = vpop.f32.mrb[0].mxu0
        %584 = vmatprep.mubr.f32.mxu0 0.0
        %585 = vmatmul.mubr.f32.gmra.mrb[0].mxu0 %v483
        %v586 = vpop.f32.mrb[0].mxu0
        %v587 = vadd.f32 0.0, %v586
        %v588 = vpop.f32.mrb[0].mxu0
        %589 = vmatprep.mubr.f32.mxu0 0.0
        %590 = vmatmul.mubr.f32.gmra.mrb[0].mxu0 %v484
        %v591 = vpop.f32.mrb[0].mxu0
        %v592 = vadd.f32 0.0, %v591
        %v593 = vpop.f32.mrb[0].mxu0
        %594 = vmatprep.mubr.f32.mxu0 0.0
        %595 = vmatmul.mubr.f32.gmra.mrb[0].mxu0 %v485
        %v596 = vpop.f32.mrb[0].mxu0
        %v597 = vadd.f32 0.0, %v596
        %v598 = vpop.f32.mrb[0].mxu0
        %599 = vmatprep.mubr.f32.mxu0 0.0
        %600 = vmatmul.mubr.f32.gmra.mrb[0].mxu0 %v486
        %v601 = vpop.f32.mrb[0].mxu0
        %v602 = vadd.f32 0.0, %v601
        %v603 = vpop.f32.mrb[0].mxu0
        %604 = vmatprep.mubr.f32.mxu0 0.0
        %605 = vmatmul.mubr.f32.gmra.mrb[0].mxu0 %v487
        %v606 = vpop.f32.mrb[0].mxu0
        %v607 = vadd.f32 0.0, %v606
        %v608 = vpop.f32.mrb[0].mxu0
        %609 = vmatprep.mubr.f32.mxu0 0.0
        %610 = vmatmul.mubr.f32.gmra.mrb[0].mxu0 %v488
        %v611 = vpop.f32.mrb[0].mxu0
        %v612 = vadd.f32 0.0, %v611
        %v613 = vpop.f32.mrb[0].mxu0
        %614 = vmatprep.mubr.f32.mxu0 0.0
        %615 = vmatmul.mubr.f32.gmra.mrb[0].mxu0 %v489
        %v616 = vpop.f32.mrb[0].mxu0
        %v617 = vadd.f32 0.0, %v616
        %v618 = vpop.f32.mrb[0].mxu0
        %619 = vdwg.mxu0
        %v620 = vadd.f32 %v490, %v582
        %v621 = vadd.f32 %v491, %v587
        %v622 = vadd.f32 %v492, %v592
        %v623 = vadd.f32 %v493, %v597
        %v624 = vadd.f32 %v494, %v602
        %v625 = vadd.f32 %v495, %v607
        %v626 = vadd.f32 %v496, %v612
        %v627 = vadd.f32 %v497, %v617
        %628 = vst [vmem:[#allocation8] sm:$0xff] %v620
        %629 = vst [vmem:[#allocation8 + $0x8] sm:$0xff] %v621
        %630 = vst [vmem:[#allocation8 + $0x10] sm:$0xff] %v622
        %631 = vst [vmem:[#allocation8 + $0x18] sm:$0xff] %v623
        %632 = vst [vmem:[#allocation8 + $0x20] sm:$0xff] %v624
        %633 = vst [vmem:[#allocation8 + $0x28] sm:$0xff] %v625
        %634 = vst [vmem:[#allocation8 + $0x30] sm:$0xff] %v626
        %635 = vst [vmem:[#allocation8 + $0x38] sm:$0xff] %v627
        %p636 = scmp.eq.s32.totalorder %s26, 2
        // Predicated region
        $region57: #{tpu_custom_call.1} parent=39 // pred_check
          %p637 = pneg %p636
        $region58: #{tpu_custom_call.1} parent=39 // pred_check_branch
          %639 = sbr.rel (%p637) target = $region60
        $region59: #{tpu_custom_call.1} parent=39 // pred_region
          %v640 = vld [vmem:[#allocation8] sm:$0xff]
          %v641 = vld [vmem:[#allocation8 + $0x8] sm:$0xff]
          %v642 = vld [vmem:[#allocation8 + $0x10] sm:$0xff]
          %v643 = vld [vmem:[#allocation8 + $0x18] sm:$0xff]
          %v644 = vld [vmem:[#allocation8 + $0x20] sm:$0xff]
          %v645 = vld [vmem:[#allocation8 + $0x28] sm:$0xff]
          %v646 = vld [vmem:[#allocation8 + $0x30] sm:$0xff]
          %v647 = vld [vmem:[#allocation8 + $0x38] sm:$0xff]
          %v648 = vld [vmem:[%s4] sm:$0x1]
          %v650 = vlaneseq
          %v651 = vshrl.u32 %v650, 7
          %v652 = vsub.s32 0, %v651
          %v653 = vrot.slane %v648, %v652
          %v655 = vadd.f32 %v640, %v653
          %v656 = vadd.f32 %v641, %v653
          %v657 = vadd.f32 %v642, %v653
          %v658 = vadd.f32 %v643, %v653
          %v659 = vadd.f32 %v644, %v653
          %v660 = vadd.f32 %v645, %v653
          %v661 = vadd.f32 %v646, %v653
          %v662 = vadd.f32 %v647, %v653
          %663 = vmax.xlane.f32.xlu0 %v655
          %v664 = vpop.xlane.xlu0 %663
          %665 = vmax.xlane.f32.xlu0 %v656
          %v666 = vpop.xlane.xlu0 %665
          %667 = vmax.xlane.f32.xlu0 %v657
          %v668 = vpop.xlane.xlu0 %667
          %669 = vmax.xlane.f32.xlu0 %v658
          %v670 = vpop.xlane.xlu0 %669
          %671 = vmax.xlane.f32.xlu0 %v659
          %v672 = vpop.xlane.xlu0 %671
          %673 = vmax.xlane.f32.xlu0 %v660
          %v674 = vpop.xlane.xlu0 %673
          %675 = vmax.xlane.f32.xlu0 %v661
          %v676 = vpop.xlane.xlu0 %675
          %677 = vmax.xlane.f32.xlu0 %v662
          %v678 = vpop.xlane.xlu0 %677
          %v679 = vsub.f32 %v655, %v664
          %v680 = vsub.f32 %v656, %v666
          %v681 = vsub.f32 %v657, %v668
          %v682 = vsub.f32 %v658, %v670
          %v683 = vsub.f32 %v659, %v672
          %v684 = vsub.f32 %v660, %v674
          %v685 = vsub.f32 %v661, %v676
          %v686 = vsub.f32 %v662, %v678
          %v687 = vmul.f32 %v679, 1.442695
          %v688 = vpow.pop %v687
          %v689 = vmul.f32 %v680, 1.442695
          %v690 = vpow.pop %v689
          %v691 = vmul.f32 %v681, 1.442695
          %v692 = vpow.pop %v691
          %v693 = vmul.f32 %v682, 1.442695
          %v694 = vpow.pop %v693
          %v695 = vmul.f32 %v683, 1.442695
          %v696 = vpow.pop %v695
          %v697 = vmul.f32 %v684, 1.442695
          %v698 = vpow.pop %v697
          %v699 = vmul.f32 %v685, 1.442695
          %v700 = vpow.pop %v699
          %v701 = vmul.f32 %v686, 1.442695
          %v702 = vpow.pop %v701
          %703 = vadd.xlane.f32.xlu0 %v688
          %v704 = vpop.xlane.xlu0 %703
          %705 = vadd.xlane.f32.xlu0 %v690
          %v706 = vpop.xlane.xlu0 %705
          %707 = vadd.xlane.f32.xlu0 %v692
          %v708 = vpop.xlane.xlu0 %707
          %709 = vadd.xlane.f32.xlu0 %v694
          %v710 = vpop.xlane.xlu0 %709
          %711 = vadd.xlane.f32.xlu0 %v696
          %v712 = vpop.xlane.xlu0 %711
          %713 = vadd.xlane.f32.xlu0 %v698
          %v714 = vpop.xlane.xlu0 %713
          %715 = vadd.xlane.f32.xlu0 %v700
          %v716 = vpop.xlane.xlu0 %715
          %717 = vadd.xlane.f32.xlu0 %v702
          %v718 = vpop.xlane.xlu0 %717
          %v719 = vlog2.pop %v704
          %v720 = vmul.f32 %v719, 0.6931472
          %v721 = vlog2.pop %v706
          %v722 = vmul.f32 %v721, 0.6931472
          %v723 = vlog2.pop %v708
          %v724 = vmul.f32 %v723, 0.6931472
          %v725 = vlog2.pop %v710
          %v726 = vmul.f32 %v725, 0.6931472
          %v727 = vlog2.pop %v712
          %v728 = vmul.f32 %v727, 0.6931472
          %v729 = vlog2.pop %v714
          %v730 = vmul.f32 %v729, 0.6931472
          %v731 = vlog2.pop %v716
          %v732 = vmul.f32 %v731, 0.6931472
          %v733 = vlog2.pop %v718
          %v734 = vmul.f32 %v733, 0.6931472
          %v735 = vsub.f32 %v679, %v720
          %v736 = vsub.f32 %v680, %v722
          %v737 = vsub.f32 %v681, %v724
          %v738 = vsub.f32 %v682, %v726
          %v739 = vsub.f32 %v683, %v728
          %v740 = vsub.f32 %v684, %v730
          %v741 = vsub.f32 %v685, %v732
          %v742 = vsub.f32 %v686, %v734
          %743 = vst [vmem:[#allocation8] sm:$0xff] %v735
          %744 = vst [vmem:[#allocation8 + $0x8] sm:$0xff] %v736
          %745 = vst [vmem:[#allocation8 + $0x10] sm:$0xff] %v737
          %746 = vst [vmem:[#allocation8 + $0x18] sm:$0xff] %v738
          %747 = vst [vmem:[#allocation8 + $0x20] sm:$0xff] %v739
          %748 = vst [vmem:[#allocation8 + $0x28] sm:$0xff] %v740
          %749 = vst [vmem:[#allocation8 + $0x30] sm:$0xff] %v741
          %750 = vst [vmem:[#allocation8 + $0x38] sm:$0xff] %v742
        $region60: #{tpu_custom_call.1} parent=39 // pred_fallthru
          _
        // Predicated region
        $region61: #{tpu_custom_call.1} parent=39 // pred_check
          %p751 = pneg %p163
        $region62: #{tpu_custom_call.1} parent=39 // pred_check_branch
          %753 = sbr.rel (%p751) target = $region64
        $region63: #{tpu_custom_call.1} parent=39 // pred_region
          %s754 = smul.u32 8, %s25
          %s756 = ssub.s32 1024, 1024
          %757 = vsyncadd [#allocation4], %s756
          %s758 = smul.addr %s754, 128
          %s759 = scalar_lea.hbm %s5, %s758
          %s760 = sshll.u32 [#allocation8], 4
          %s761 = int_to_ptr.vmem [resolvable:$true] %s760
          %766 = dma.vmem_to_hbm [thread:$0]  %s761, 1024, %s759, [#allocation4], 128, 128, 8
        $region64: #{tpu_custom_call.1} parent=39 // pred_fallthru
          _
        // Predicated region
        $region65: #{tpu_custom_call.1} parent=39 // pred_check
          %p767 = pneg %p163
        $region66: #{tpu_custom_call.1} parent=39 // pred_check_branch
          %769 = sbr.rel (%p767) target = $region68
        $region67: #{tpu_custom_call.1} parent=39 // pred_region
          %770 = dma.done [#allocation4], 1024
        $region68: #{tpu_custom_call.1} parent=39 // pred_fallthru
          _
      $region40: #{tpu_custom_call.1} parent=5 // pred_fallthru
        _
      %p771 = scmp.le.s32.totalorder 2, %s16
      // Predicated region
      $region69: #{tpu_custom_call.1} parent=5 // pred_check
        %p772 = pneg %p771
      $region70: #{tpu_custom_call.1} parent=5 // pred_check_branch
        %774 = sbr.rel (%p772) target = $region72
      $region71: #{tpu_custom_call.1} parent=5 // pred_region
        %s775 = ssub.s32 %s16, 2
      $region72: #{tpu_custom_call.1} parent=5 // pred_fallthru
        _
    $region6: #{tpu_custom_call.1} parent=1 // loop_footer
      %s20 = sadd.s32 1, %s16
    $region7: #{tpu_custom_call.1} parent=1 // loop_footer_branch
      %15 = sbr.rel target = $region3
    $region8: #{tpu_custom_call.1} parent=1 // loop_exit
      _
    %776 = vsyncpa [#allocation3], 1
    %s777 = scalar_lea.sflag [#allocation3], 1
    %778 = vsyncpa %s777, 1
    %779 = vsyncpa [#allocation6], 1
    %780 = vsyncpa [#allocation4], 1
    %s781 = scalar_lea.sflag [#allocation4], 1
    %782 = vsyncpa %s781, 1

</llo_original>
